<compile_context>
chip_gen: v7x
topology: tpu7x:2x2x1
jax: 0.10.0
libtpu: 0.0.40
codegen_flags: <defaults>
</compile_context>

<pallas_src>
import functools

import numpy as np
import jax
import jax.numpy as jnp
from jax.experimental import pallas as pl
from jax.experimental.pallas import tpu as pltpu


def _round_up(x, m):
    return ((x + m - 1) // m) * m


def _hc_loss_kernel(sum_ref, feats_ref, o_ref, gram_ref, *,
                    label_num, inv_chunk, margin):
    # sum_ref:   (n, batch)  block-diagonal 0/1 chunk-sum matrix (resident)
    # feats_ref: (batch, TF) current feat_dim tile
    # o_ref:     (1, 1)      scalar loss in SMEM
    # gram_ref:  (n, n)      f32 accumulator for centers @ centers.T
    n = gram_ref.shape[0]
    k = pl.program_id(0)

    @pl.when(k == 0)
    def _init():
        gram_ref[...] = jnp.zeros_like(gram_ref)

    # Chunk means for this feat_dim tile on the MXU: (n, batch) @ (batch, TF).
    centers = jnp.dot(sum_ref[...], feats_ref[...],
                      preferred_element_type=jnp.float32) * inv_chunk

    # Accumulate the gram matrix over feat_dim tiles; contracting dim 1 of
    # both operands avoids a materialized XLU transpose of `centers`.
    gram_ref[...] += jax.lax.dot_general(
        centers, centers,
        dimension_numbers=(((1,), (1,)), ((), ())),
        preferred_element_type=jnp.float32)

    @pl.when(k == pl.num_programs(0) - 1)
    def _finalize():
        gram = gram_ref[...]
        row = jax.lax.broadcasted_iota(jnp.int32, (n, n), 0)
        col = jax.lax.broadcasted_iota(jnp.int32, (n, n), 1)
        eye = row == col

        # Squared norms straight from the gram diagonal (no second norm pass).
        diag = jnp.where(eye, gram, 0.0)
        sq_col = jnp.sum(diag, axis=1, keepdims=True)   # (n, 1)  ||c_i||^2
        sq_row = jnp.sum(diag, axis=0, keepdims=True)   # (1, n)  ||c_j||^2
        dist2 = jnp.maximum(sq_col + sq_row - 2.0 * gram, 1e-12)

        # targets = cat([unique_labels, unique_labels]) (distinct values)
        # => same identity  iff  i % label_num == j % label_num
        mask = (row % label_num) == (col % label_num)
        ap2 = jnp.max(jnp.where(mask, dist2, -jnp.inf), axis=1, keepdims=True)
        an2 = jnp.min(jnp.where(mask, jnp.inf, dist2), axis=1, keepdims=True)

        # sqrt is monotone, so max/min over squared distances is equivalent;
        # only 2n transcendentals instead of n^2.
        dist_ap = jnp.sqrt(ap2)
        dist_an = jnp.sqrt(an2)

        # MarginRankingLoss(dist_an, dist_ap, y=1), reduction='mean'
        hinge = jnp.maximum(dist_ap - dist_an + margin, 0.0)   # (n, 1)
        o_ref[0, 0] = jnp.sum(hinge) / n


@functools.lru_cache(maxsize=32)
def _sum_matrix(n, chunk, dtype_name):
    # (n, batch) block-diagonal 0/1 matrix: row i sums chunk i. Built on host
    # once per (n, chunk, dtype); 0/1 values are exact in bf16.
    m = np.repeat(np.eye(n, dtype=np.float32), chunk, axis=1)
    return jnp.asarray(m, dtype=jnp.dtype(dtype_name))


def hc_loss(feats, labels, margin=0.3, max_tile=2048):
    """Pallas implementation of HCLoss.forward.

    feats:  (batch, feat_dim) float array (f32 or bf16; other dtypes upcast)
    labels: (batch,) int array.  Must be concrete (host readable): label_num
            comes from np.unique, exactly like torch's data-dependent
            labels.unique().  Rows of `feats` must form 2*label_num contiguous
            equal chunks ordered consistently with the sorted unique labels
            (same assumption the PyTorch module makes).
    max_tile: cap on the feat_dim tile width streamed per grid step (lanes).
    """
    feats = jnp.asarray(feats)
    if feats.dtype not in (jnp.float32, jnp.bfloat16):
        feats = feats.astype(jnp.float32)

    labels_np = np.asarray(labels)
    label_num = int(np.unique(labels_np).shape[0])
    assert label_num >= 2, "HCLoss needs >= 2 identities (negative set empty)"
    n = 2 * label_num
    batch, feat_dim = feats.shape
    assert batch % n == 0, "batch must split evenly into 2 * label_num chunks"
    chunk = batch // n

    # Lane-dense layout: pad feat_dim to a multiple of 128 (zeros contribute
    # nothing to the gram / norms, so no masking is needed).
    feat_pad = _round_up(feat_dim, 128)
    if feat_pad != feat_dim:
        feats = jnp.pad(feats, ((0, 0), (0, feat_pad - feat_dim)))

    # Tile size over feat_dim: whole thing if it fits under the cap, otherwise
    # the largest power-of-two tile (>= 128) dividing feat_pad.  Wide tiles
    # amortize the ~0.35us/step pipeline overhead; the kernel stays mem-bound.
    max_tile = max(128, min(int(max_tile), 2048))
    if feat_pad <= max_tile:
        tf = feat_pad
    else:
        tf = next(c for c in (2048, 1024, 512, 256, 128)
                  if c <= max_tile and feat_pad % c == 0)
    num_tiles = feat_pad // tf

    sum_mat = _sum_matrix(n, chunk, jnp.dtype(feats.dtype).name)

    # Explicit VMEM budget (works on v5e/v6e 128 MiB and v7x 64 MiB parts):
    # resident sum_mat + double-buffered feats tiles + gram scratch + slack.
    itemsize = jnp.dtype(feats.dtype).itemsize
    sub = 8 * (4 // itemsize)                      # 8 sublanes f32, 16 bf16
    feats_blk = _round_up(batch, sub) * tf * itemsize
    summat_blk = _round_up(n, sub) * _round_up(batch, 128) * itemsize
    gram_blk = _round_up(n, 8) * _round_up(n, 128) * 4
    vmem_limit = int(2 * feats_blk + 2 * summat_blk + gram_blk + (2 << 20))
    vmem_limit = min(max(vmem_limit, 4 << 20), 64 << 20)

    kernel = functools.partial(_hc_loss_kernel, label_num=label_num,
                               inv_chunk=1.0 / chunk, margin=float(margin))

    out = pl.pallas_call(
        kernel,
        out_shape=jax.ShapeDtypeStruct((1, 1), jnp.float32),
        grid=(num_tiles,),
        in_specs=[
            pl.BlockSpec((n, batch), lambda k: (0, 0)),    # resident sum matrix
            pl.BlockSpec((batch, tf), lambda k: (0, k)),   # streamed feats tile
        ],
        out_specs=pl.BlockSpec((1, 1), lambda k: (0, 0),
                               memory_space=pltpu.MemorySpace.SMEM),
        scratch_shapes=[pltpu.VMEM((n, n), jnp.float32)],
        compiler_params=pltpu.CompilerParams(
            dimension_semantics=("arbitrary",),
            vmem_limit_bytes=vmem_limit),
    )(sum_mat, feats)
    return out[0, 0]


def _hc_loss_reference(feats, labels, margin=0.3):
    """Pure numpy (f64) reference mirroring the PyTorch module."""
    feats = np.asarray(feats, np.float64)
    labels = np.asarray(labels)
    label_uni = np.unique(labels)
    label_num = len(label_uni)
    targets = np.concatenate([label_uni, label_uni])
    n = 2 * label_num
    chunks = np.split(feats, n, axis=0)
    centers = np.stack([c.mean(axis=0) for c in chunks], axis=0)
    sq = (centers ** 2).sum(axis=1, keepdims=True)
    dist = np.sqrt(np.clip(sq + sq.T - 2.0 * centers @ centers.T, 1e-12, None))
    mask = targets[:, None] == targets[None, :]
    dist_ap = np.array([dist[i][mask[i]].max() for i in range(n)])
    dist_an = np.array([dist[i][~mask[i]].min() for i in range(n)])
    return float(np.mean(np.maximum(dist_ap - dist_an + margin, 0.0)))


if __name__ == "__main__":
    key = jax.random.PRNGKey(0)
    label_num = 4       # identities
    per_chunk = 2       # samples per identity per modality
    batch = 2 * label_num * per_chunk     # 16
    feat_dim = 1000     # exercises lane padding (-> 1024)

    # labels arranged as [visible chunks..., thermal chunks...]
    labels = np.repeat(np.arange(label_num, dtype=np.int32), per_chunk)
    labels = np.concatenate([labels, labels])  # (16,)

    feats = jax.random.normal(key, (batch, feat_dim), dtype=jnp.float32)

    # max_tile=512 forces a 2-step grid so the streamed/accumulate path is
    # exercised even at this small feat_dim.
    loss = jax.block_until_ready(hc_loss(feats, labels, margin=0.3,
                                         max_tile=512))

    ref = _hc_loss_reference(np.asarray(feats), labels, margin=0.3)
    np.testing.assert_allclose(float(loss), ref, rtol=1e-4, atol=1e-5)

    print("KERNEL_OK")
</pallas_src>

<mosaic_0001>
module attributes {stable_mosaic.version = 11 : i64} {
  func.func @_hc_loss_kernel(%arg0: i32, %arg1: memref<8x16xf32, #tpu.memory_space<vmem>>, %arg2: memref<16x512xf32, #tpu.memory_space<vmem>>, %arg3: memref<1x1xf32, #tpu.memory_space<smem>>, %arg4: memref<8x8xf32, #tpu.memory_space<vmem>>) attributes {dimension_semantics = [#tpu.dimension_semantics<arbitrary>], iteration_bounds = array<i64: 2>, scalar_prefetch = 0 : i64, scratch_operands = 1 : i64, tpu.core_type = #tpu.core_type<tc>, window_params = [{pipeline_mode = #tpu.pipeline_mode<synchronous>, transform_indices = @transform_0, window_bounds = array<i64: 8, 16>}, {transform_indices = @transform_1, window_bounds = array<i64: 16, 512>}, {transform_indices = @transform_2, window_bounds = array<i64: 1, 1>}]} {
    %c0_i32 = arith.constant 0 : i32
    %0 = arith.cmpi eq, %arg0, %c0_i32 : i32
    %1 = arith.extui %0 : i1 to i32
    %c0_i32_0 = arith.constant 0 : i32
    %2 = arith.cmpi ne, %1, %c0_i32_0 : i32
    scf.if %2 {
      %cst_11 = arith.constant 0.000000e+00 : f32
      %15 = vector.broadcast %cst_11 : f32 to vector<8x8xf32>
      %c0_12 = arith.constant 0 : index
      %c0_13 = arith.constant 0 : index
      %16 = vector.load %arg4[%c0_12, %c0_13] : memref<8x8xf32, #tpu.memory_space<vmem>>, vector<8x8xf32>
      tpu.vector_store %arg4[%c0_12, %c0_13], %15 {strides = array<i32>} : memref<8x8xf32, #tpu.memory_space<vmem>>, vector<8x8xf32>,
    } else {
    }
    %c0 = arith.constant 0 : index
    %c0_1 = arith.constant 0 : index
    %3 = vector.load %arg1[%c0, %c0_1] : memref<8x16xf32, #tpu.memory_space<vmem>>, vector<8x16xf32>
    %c0_2 = arith.constant 0 : index
    %c0_3 = arith.constant 0 : index
    %4 = vector.load %arg2[%c0_2, %c0_3] : memref<16x512xf32, #tpu.memory_space<vmem>>, vector<16x512xf32>
    %cst = arith.constant dense<0.000000e+00> : vector<8x512xf32>
    %5 = tpu.matmul %3, %4, %cst {dimension_numbers = #tpu.dot_dimension_numbers<[1], [0], [0], [1], [0, 0, 1, 1], [], []>} : vector<8x16xf32>, vector<16x512xf32>, vector<8x512xf32> -> vector<8x512xf32>
    %cst_4 = arith.constant 5.000000e-01 : f32
    %6 = vector.broadcast %cst_4 : f32 to vector<8x512xf32>
    %7 = arith.mulf %5, %6 : vector<8x512xf32>
    %c0_5 = arith.constant 0 : index
    %c0_6 = arith.constant 0 : index
    %8 = vector.load %arg4[%c0_5, %c0_6] : memref<8x8xf32, #tpu.memory_space<vmem>>, vector<8x8xf32>
    %cst_7 = arith.constant dense<0.000000e+00> : vector<8x8xf32>
    %9 = tpu.matmul %7, %7, %cst_7 {dimension_numbers = #tpu.dot_dimension_numbers<[1], [1], [0], [0], [0, 0, 1, 0], [], []>} : vector<8x512xf32>, vector<8x512xf32>, vector<8x8xf32> -> vector<8x8xf32>
    %10 = arith.addf %8, %9 : vector<8x8xf32>
    %c0_8 = arith.constant 0 : index
    %c0_9 = arith.constant 0 : index
    %11 = vector.load %arg4[%c0_8, %c0_9] : memref<8x8xf32, #tpu.memory_space<vmem>>, vector<8x8xf32>
    tpu.vector_store %arg4[%c0_8, %c0_9], %10 {strides = array<i32>} : memref<8x8xf32, #tpu.memory_space<vmem>>, vector<8x8xf32>,
    %c1_i32 = arith.constant 1 : i32
    %12 = arith.cmpi eq, %arg0, %c1_i32 : i32
    %13 = arith.extui %12 : i1 to i32
    %c0_i32_10 = arith.constant 0 : i32
    %14 = arith.cmpi ne, %13, %c0_i32_10 : i32
    scf.if %14 {
      %c0_11 = arith.constant 0 : index
      %c0_12 = arith.constant 0 : index
      %15 = vector.load %arg4[%c0_11, %c0_12] : memref<8x8xf32, #tpu.memory_space<vmem>>, vector<8x8xf32>
      %16 = tpu.iota {dimensions = array<i32: 0>} : vector<8x8xi32>
      %17 = tpu.iota {dimensions = array<i32: 1>} : vector<8x8xi32>
      %18 = arith.cmpi eq, %16, %17 : vector<8x8xi32>
      %cst_13 = arith.constant 0.000000e+00 : f32
      %19 = vector.broadcast %cst_13 : f32 to vector<8x8xf32>
      %20 = arith.select %18, %15, %19 : vector<8x8xi1>, vector<8x8xf32>
      %cst_14 = arith.constant dense<0.000000e+00> : vector<8xf32>
      %21 = vector.multi_reduction <add>, %20, %cst_14 [1] : vector<8x8xf32> to vector<8xf32>
      %22 = vector.shape_cast %21 : vector<8xf32> to vector<8x1xf32>
      %cst_15 = arith.constant dense<0.000000e+00> : vector<8xf32>
      %23 = vector.multi_reduction <add>, %20, %cst_15 [0] : vector<8x8xf32> to vector<8xf32>
      %24 = vector.shape_cast %23 : vector<8xf32> to vector<1x8xf32>
      %25 = vector.broadcast %22 : vector<8x1xf32> to vector<8x8xf32>
      %26 = vector.broadcast %24 : vector<1x8xf32> to vector<8x8xf32>
      %27 = arith.addf %25, %26 : vector<8x8xf32>
      %cst_16 = arith.constant 2.000000e+00 : f32
      %28 = vector.broadcast %cst_16 : f32 to vector<8x8xf32>
      %29 = arith.mulf %28, %15 : vector<8x8xf32>
      %30 = arith.subf %27, %29 : vector<8x8xf32>
      %cst_17 = arith.constant 9.99999996E-13 : f32
      %31 = vector.broadcast %cst_17 : f32 to vector<8x8xf32>
      %32 = arith.maximumf %30, %31 : vector<8x8xf32>
      %c4_i32 = arith.constant 4 : i32
      %c0_i32_18 = arith.constant 0 : i32
      %33 = arith.cmpi eq, %c4_i32, %c0_i32_18 : i32
      %c1_i32_19 = arith.constant 1 : i32
      %34 = arith.select %33, %c1_i32_19, %c4_i32 : i32
      %35 = vector.broadcast %34 : i32 to vector<8x8xi32>
      %36 = arith.remsi %16, %35 : vector<8x8xi32>
      %c0_i32_20 = arith.constant 0 : i32
      %37 = vector.broadcast %c0_i32_20 : i32 to vector<8x8xi32>
      %38 = arith.cmpi ne, %36, %37 : vector<8x8xi32>
      %c0_i32_21 = arith.constant 0 : i32
      %39 = vector.broadcast %c0_i32_21 : i32 to vector<8x8xi32>
      %40 = arith.cmpi slt, %36, %39 : vector<8x8xi32>
      %c0_i32_22 = arith.constant 0 : i32
      %41 = arith.cmpi slt, %34, %c0_i32_22 : i32
      %42 = vector.broadcast %41 : i1 to vector<8x8xi1>
      %43 = vector.broadcast %42 : vector<8x8xi1> to vector<8x8xi1>
      %44 = arith.xori %40, %43 : vector<8x8xi1>
      %45 = arith.andi %44, %38 : vector<8x8xi1>
      %46 = vector.broadcast %34 : i32 to vector<8x8xi32>
      %47 = arith.addi %36, %46 : vector<8x8xi32>
      %48 = arith.select %45, %47, %36 : vector<8x8xi1>, vector<8x8xi32>
      %c4_i32_23 = arith.constant 4 : i32
      %c0_i32_24 = arith.constant 0 : i32
      %49 = arith.cmpi eq, %c4_i32_23, %c0_i32_24 : i32
      %c1_i32_25 = arith.constant 1 : i32
      %50 = arith.select %49, %c1_i32_25, %c4_i32_23 : i32
      %51 = vector.broadcast %50 : i32 to vector<8x8xi32>
      %52 = arith.remsi %17, %51 : vector<8x8xi32>
      %c0_i32_26 = arith.constant 0 : i32
      %53 = vector.broadcast %c0_i32_26 : i32 to vector<8x8xi32>
      %54 = arith.cmpi ne, %52, %53 : vector<8x8xi32>
      %c0_i32_27 = arith.constant 0 : i32
      %55 = vector.broadcast %c0_i32_27 : i32 to vector<8x8xi32>
      %56 = arith.cmpi slt, %52, %55 : vector<8x8xi32>
      %c0_i32_28 = arith.constant 0 : i32
      %57 = arith.cmpi slt, %50, %c0_i32_28 : i32
      %58 = vector.broadcast %57 : i1 to vector<8x8xi1>
      %59 = vector.broadcast %58 : vector<8x8xi1> to vector<8x8xi1>
      %60 = arith.xori %56, %59 : vector<8x8xi1>
      %61 = arith.andi %60, %54 : vector<8x8xi1>
      %62 = vector.broadcast %50 : i32 to vector<8x8xi32>
      %63 = arith.addi %52, %62 : vector<8x8xi32>
      %64 = arith.select %61, %63, %52 : vector<8x8xi1>, vector<8x8xi32>
      %65 = arith.cmpi eq, %48, %64 : vector<8x8xi32>
      %cst_29 = arith.constant 0xFF800000 : f32
      %66 = vector.broadcast %cst_29 : f32 to vector<8x8xf32>
      %67 = arith.select %65, %32, %66 : vector<8x8xi1>, vector<8x8xf32>
      %cst_30 = arith.constant dense<0xFF800000> : vector<8xf32>
      %68 = vector.multi_reduction <maximumf>, %67, %cst_30 [1] : vector<8x8xf32> to vector<8xf32>
      %69 = vector.shape_cast %68 : vector<8xf32> to vector<8x1xf32>
      %cst_31 = arith.constant 0x7F800000 : f32
      %70 = vector.broadcast %cst_31 : f32 to vector<8x8xf32>
      %71 = arith.select %65, %70, %32 : vector<8x8xi1>, vector<8x8xf32>
      %cst_32 = arith.constant dense<0x7F800000> : vector<8xf32>
      %72 = vector.multi_reduction <minimumf>, %71, %cst_32 [1] : vector<8x8xf32> to vector<8xf32>
      %73 = vector.shape_cast %72 : vector<8xf32> to vector<8x1xf32>
      %74 = math.sqrt %69 : vector<8x1xf32>
      %75 = math.sqrt %73 : vector<8x1xf32>
      %76 = arith.subf %74, %75 : vector<8x1xf32>
      %cst_33 = arith.constant 3.000000e-01 : f32
      %77 = vector.broadcast %cst_33 : f32 to vector<8x1xf32>
      %78 = arith.addf %76, %77 : vector<8x1xf32>
      %cst_34 = arith.constant 0.000000e+00 : f32
      %79 = vector.broadcast %cst_34 : f32 to vector<8x1xf32>
      %80 = arith.maximumf %78, %79 : vector<8x1xf32>
      %81 = vector.shape_cast %80 : vector<8x1xf32> to vector<1x8x1xf32>
      %cst_35 = arith.constant dense<0.000000e+00> : vector<1xf32>
      %82 = vector.multi_reduction <add>, %81, %cst_35 [1, 2] : vector<1x8x1xf32> to vector<1xf32>
      %83 = vector.shape_cast %82 : vector<1xf32> to vector<1x1x1xf32>
      %84 = vector.extract %83[0, 0, 0] : f32 from vector<1x1x1xf32>
      %cst_36 = arith.constant 8.000000e+00 : f32
      %85 = arith.divf %84, %cst_36 : f32
      %c0_37 = arith.constant 0 : index
      %c0_38 = arith.constant 0 : index
      %86 = memref.load %arg3[%c0_37, %c0_38] : memref<1x1xf32, #tpu.memory_space<smem>>
      memref.store %85, %arg3[%c0_37, %c0_38] : memref<1x1xf32, #tpu.memory_space<smem>>
    } else {
    }
    return
  }
  func.func @transform_0(%arg0: i32) -> (i32, i32) {
    %c0_i32 = arith.constant 0 : i32
    %c0_i32_0 = arith.constant 0 : i32
    %c0_i32_1 = arith.constant 0 : i32
    return %c0_i32, %c0_i32_0 : i32, i32
  }
  func.func @transform_1(%arg0: i32) -> (i32, i32) {
    %c0_i32 = arith.constant 0 : i32
    %c0_i32_0 = arith.constant 0 : i32
    return %c0_i32, %arg0 : i32, i32
  }
  func.func @transform_2(%arg0: i32) -> (i32, i32) {
    %c0_i32 = arith.constant 0 : i32
    %c0_i32_0 = arith.constant 0 : i32
    %c0_i32_1 = arith.constant 0 : i32
    return %c0_i32, %c0_i32_0 : i32, i32
  }
}

</mosaic_0001>

<llo_original>
// kernel: tpu_custom_call.1
$region0: #{tpu_custom_call.1}
  #allocation0 [shape = 'u32[]', space=smem, size = 0x4, offset = 0x4, fixed_abs, tag = 'smem constant byte address 0x4 - core index']
  #allocation1 [shape = 'u32[144,128]{1,0:T(1,128)}', space=vmem, size = 0x12000, scoped, tag = 'internal scratch']
  #allocation2 [shape = 'f32[8,8]{1,0:T(8,128)}', space=vmem, size = 0x1000, scoped, tag = 'scratch operand']
  %s0 = inlined_call_operand.hbm [shape: f32[8,16], index: 0, kind: input, shape index: {}]
  %s1 = inlined_call_operand.hbm [shape: f32[16,1024], index: 1, kind: input, shape index: {}]
  %s2 = inlined_call_operand.hbm [shape: f32[1,1], index: 2, kind: output, shape index: {}]
  %s3 = sld [smem:[#allocation0]]
  $region57: #{tpu_custom_call.1} parent=0
    _
  %s5 = ssub.s32 1, %s3
  %s6 = scalar_select 0, %s5, %s3
  $region1: #{tpu_custom_call.1} parent=0
    #allocation3 [shape = 'u8[4096]{0}', space=vmem, size = 0x1000, scoped, tag = 'input window, operand 0, single buffered']
    #allocation4 [shape = 's32[2]{0}', space=sflag, size = 0x8, scoped, tag = 'scoped memory for tpu_custom_call.1']
    #allocation5 [shape = 's32[2]{0}', space=sflag, size = 0x8, scoped, tag = 'scoped memory for tpu_custom_call.1']
    #allocation6 [shape = 'u8[65536]{0}', space=vmem, size = 0x10000, scoped, tag = 'input window, operand 1']
    #allocation7 [shape = 's32[2]{0}', space=sflag, size = 0x8, scoped, tag = 'scoped memory for tpu_custom_call.1']
    #allocation8 [shape = 'u8[512]{0}', space=smem, size = 0x200, scoped, tag = 'output window, operand 0, single buffered']
    %7 = vsyncpa [#allocation4], 0
    %8 = vsyncpa [#allocation7], 0
    %s9 = scalar_lea.sflag [#allocation7], 1
    %10 = vsyncpa %s9, 0
    %11 = vsyncpa [#allocation5], 0
    loop: start=0, step=1, limit=4
    $region2: #{tpu_custom_call.1} parent=1 // loop_pre_header
      _
    $region3: #{tpu_custom_call.1} parent=1 // loop_header
      %s13 = sphi 0, %s17
      %p14 = scmp.ge.s32.totalorder %s13, 4
      %s21 = sphi 0, %s21
      %s23 = sphi 0, %s21
      %s24 = sphi 0, %s23
      %s38 = sphi 0, %s24
      %s44 = sphi 0, %s46
      %s47 = sphi 0, %s44
      %s48 = sphi 0, %s47
      %s64 = sphi 0, %s48
      %s68 = sphi 0, %s68
      %s70 = sphi 0, %s68
      %s71 = sphi 0, %s70
      %s85 = sphi 0, %s71
    $region4: #{tpu_custom_call.1} parent=1 // loop_header_branch
      %16 = sbr.rel (%p14) target = $region8
    $region5: #{tpu_custom_call.1} parent=1 // loop_body
      %s18 = ssub.s32 %s13, 1
      %s19 = ssub.s32 %s13, 2
      %s20 = sadd.s32 %s13, 1
      %s22 = sadd.s32 %s21, 1
      %p25 = scmp.eq.s32.totalorder %s13, 1
      %p26 = scmp.ne.s32.totalorder %s21, %s23
      %p27 = scmp.eq.s32.totalorder %s13, 0
      %p28 = por %p26, %p27
      %p29 = scmp.ne.s32.totalorder %s21, %s23
      %p30 = scmp.eq.s32.totalorder %s18, 1
      %p31 = por %p29, %p30
      %p32 = scmp.ne.s32.totalorder %s23, %s24
      %p33 = scmp.eq.s32.totalorder %s18, 0
      %p34 = por %p32, %p33
      %p35 = scmp.ne.s32.totalorder %s23, %s24
      %p36 = scmp.eq.s32.totalorder %s19, 1
      %p37 = por %p35, %p36
      %p39 = scmp.ne.s32.totalorder %s24, %s38
      %p40 = scmp.eq.s32.totalorder %s19, 0
      %p41 = por %p39, %p40
      %s42 = ssub.s32 %s13, %s20
      %p43 = scmp.eq.s32.totalorder %s42, 0
      %s45 = sadd.s32 %s44, 1
      %s46 = scalar_select %p43, %s44, %s45
      %p49 = pneg %p43
      %p50 = scmp.eq.s32.totalorder %s13, 1
      %p51 = por %p49, %p50
      %p52 = scmp.ne.s32.totalorder %s44, %s47
      %p53 = scmp.eq.s32.totalorder %s13, 0
      %p54 = por %p52, %p53
      %p55 = scmp.ne.s32.totalorder %s44, %s47
      %p56 = scmp.eq.s32.totalorder %s18, 1
      %p57 = por %p55, %p56
      %p58 = scmp.ne.s32.totalorder %s47, %s48
      %p59 = scmp.eq.s32.totalorder %s18, 0
      %p60 = por %p58, %p59
      %p61 = scmp.ne.s32.totalorder %s47, %s48
      %p62 = scmp.eq.s32.totalorder %s19, 1
      %p63 = por %p61, %p62
      %p65 = scmp.ne.s32.totalorder %s48, %s64
      %p66 = scmp.eq.s32.totalorder %s19, 0
      %p67 = por %p65, %p66
      %s69 = sadd.s32 %s68, 1
      %p72 = scmp.eq.s32.totalorder %s13, 1
      %p73 = scmp.ne.s32.totalorder %s68, %s70
      %p74 = scmp.eq.s32.totalorder %s13, 0
      %p75 = por %p73, %p74
      %p76 = scmp.ne.s32.totalorder %s68, %s70
      %p77 = scmp.eq.s32.totalorder %s18, 1
      %p78 = por %p76, %p77
      %p79 = scmp.ne.s32.totalorder %s70, %s71
      %p80 = scmp.eq.s32.totalorder %s18, 0
      %p81 = por %p79, %p80
      %p82 = scmp.ne.s32.totalorder %s70, %s71
      %p83 = scmp.eq.s32.totalorder %s19, 1
      %p84 = por %p82, %p83
      %p86 = scmp.ne.s32.totalorder %s71, %s85
      %p87 = scmp.eq.s32.totalorder %s19, 0
      %p88 = por %p86, %p87
      %p89 = scmp.le.s32.totalorder 1, %s13
      %p90 = scmp.lt.s32.totalorder %s13, 3
      %p91 = pnand %p89, %p90
      %p92 = pneg %p91
      // Predicated region
      $region9: #{tpu_custom_call.1} parent=5 // pred_check
        _
      $region10: #{tpu_custom_call.1} parent=5 // pred_check_branch
        %94 = sbr.rel (%p91) target = $region12
      $region11: #{tpu_custom_call.1} parent=5 // pred_region
        %s95 = ssub.s32 %s13, 1
        // Predicated region
        $region13: #{tpu_custom_call.1} parent=11 // pred_check
          %p96 = pneg %p34
        $region14: #{tpu_custom_call.1} parent=11 // pred_check_branch
          %98 = sbr.rel (%p96) target = $region16
        $region15: #{tpu_custom_call.1} parent=11 // pred_region
          %s100 = ssub.s32 128, 128
          %101 = vsyncadd [#allocation4], %s100
          %s103 = sshll.u32 [#allocation3], 4
          %s104 = int_to_ptr.vmem [resolvable:$true] %s103
          %106 = dma.hbm_to_vmem [thread:$0]  %s0, 128, %s104, [#allocation4]
        $region16: #{tpu_custom_call.1} parent=11 // pred_fallthru
          _
      $region12: #{tpu_custom_call.1} parent=5 // pred_fallthru
        _
      %p107 = scmp.lt.s32.totalorder %s13, 2
      // Predicated region
      $region17: #{tpu_custom_call.1} parent=5 // pred_check
        %p108 = pneg %p107
      $region18: #{tpu_custom_call.1} parent=5 // pred_check_branch
        %110 = sbr.rel (%p108) target = $region20
      $region19: #{tpu_custom_call.1} parent=5 // pred_region
        // Predicated region
        $region21: #{tpu_custom_call.1} parent=19 // pred_check
          %p111 = pneg %p54
        $region22: #{tpu_custom_call.1} parent=19 // pred_check_branch
          %113 = sbr.rel (%p111) target = $region24
        $region23: #{tpu_custom_call.1} parent=19 // pred_region
          %s114 = sand.u32 %s44, 1
          %s115 = scalar_lea.sflag [#allocation7], %s114
          %s116 = sand.u32 %s44, 1
          %s117 = smul.addr %s116, 64
          %s118 = scalar_lea.vmem [#allocation6], %s117
          %s119 = smul.u32 4, %s13
          %s121 = ssub.s32 1024, 1024
          %122 = vsyncadd %s115, %s121
          %s123 = smul.addr %s119, 128
          %s124 = scalar_lea.hbm %s1, %s123
          %s125 = sshll.u32 %s118, 4
          %s126 = int_to_ptr.vmem [resolvable:$true] %s125
          %131 = dma.hbm_to_vmem [thread:$0]  %s124, 1024, %s126, %s115, 1024, 512, 32
        $region24: #{tpu_custom_call.1} parent=19 // pred_fallthru
          _
      $region20: #{tpu_custom_call.1} parent=5 // pred_fallthru
        _
      %p132 = scmp.le.s32.totalorder 1, %s13
      %p133 = scmp.lt.s32.totalorder %s13, 3
      %p134 = pnand %p132, %p133
      %p135 = pneg %p134
      // Predicated region
      $region25: #{tpu_custom_call.1} parent=5 // pred_check
        _
      $region26: #{tpu_custom_call.1} parent=5 // pred_check_branch
        %137 = sbr.rel (%p134) target = $region28
      $region27: #{tpu_custom_call.1} parent=5 // pred_region
        %s138 = ssub.s32 %s13, 1
        // Predicated region
        $region29: #{tpu_custom_call.1} parent=27 // pred_check
          %p139 = pneg %p34
        $region30: #{tpu_custom_call.1} parent=27 // pred_check_branch
          %141 = sbr.rel (%p139) target = $region32
        $region31: #{tpu_custom_call.1} parent=27 // pred_region
          %142 = dma.done [#allocation4], 128
        $region32: #{tpu_custom_call.1} parent=27 // pred_fallthru
          _
        %s143 = sand.u32 %s47, 1
        %s144 = scalar_lea.sflag [#allocation7], %s143
        %s145 = sand.u32 %s47, 1
        %s146 = smul.addr %s145, 64
        %s147 = scalar_lea.vmem [#allocation6], %s146
        // Predicated region
        $region33: #{tpu_custom_call.1} parent=27 // pred_check
          %p148 = pneg %p60
        $region34: #{tpu_custom_call.1} parent=27 // pred_check_branch
          %150 = sbr.rel (%p148) target = $region36
        $region35: #{tpu_custom_call.1} parent=27 // pred_region
          %151 = dma.done %s144, 1024
        $region36: #{tpu_custom_call.1} parent=27 // pred_fallthru
          _
        %p152 = pneg %p34
        %p153 = pneg %p31
        %s154 = sand.u32 %s47, 1
        %s155 = scalar_lea.sflag [#allocation7], %s154
        %s156 = sand.u32 %s47, 1
        %s157 = smul.addr %s156, 64
        %s158 = scalar_lea.vmem [#allocation6], %s157
        %p159 = pneg %p60
        %p160 = pneg %p57
        %p161 = pneg %p81
        %p162 = pneg %p78
        %s163 = smul.u32 4, %s18
        %p164 = scmp.eq.s32.totalorder %s18, 0
        // Predicated region
        $region37: #{tpu_custom_call.1} parent=27 // pred_check
          %p165 = pneg %p164
        $region38: #{tpu_custom_call.1} parent=27 // pred_check_branch
          %167 = sbr.rel (%p165) target = $region40
        $region39: #{tpu_custom_call.1} parent=27 // pred_region
          %vm168 = vcmask 64512
          %169 = vst.msk [vmem:[#allocation2] sm:$0xff] %vm168, 0.0
        $region40: #{tpu_custom_call.1} parent=27 // pred_fallthru
          _
        %v170 = vld [vmem:[#allocation3] sm:$0xff]
        %v171 = vld [vmem:[%s147] sm:$0xff]
        %v172 = vld [vmem:[%s147 + $0x8] sm:$0xff]
        %v173 = vld [vmem:[%s147 + $0x10] sm:$0xff]
        %v174 = vld [vmem:[%s147 + $0x18] sm:$0xff]
        %v175 = vld [vmem:[%s147 + $0x20] sm:$0xff]
        %v176 = vld [vmem:[%s147 + $0x28] sm:$0xff]
        %v177 = vld [vmem:[%s147 + $0x30] sm:$0xff]
        %v178 = vld [vmem:[%s147 + $0x38] sm:$0xff]
        %vm179 = vcmask 130048
        %v181 = vsel %vm179, %v170, 0
        %183 = vmatprep.subr.mxu0 %v172
        %184 = vmatpush1.msra.mxu0 %v171
        %185 = vmatprep.subr.mxu0 %v176
        %186 = vmatpush1.msra.mxu0 %v175
        %187 = vmatprep.subr.mxu0 0.0
        %188 = vmatpush1.msra.mxu0 0.0
        %189 = vmatprep.subr.mxu0 0.0
        %190 = vmatpush1.msra.mxu0 0.0
        %191 = vmatprep.subr.mxu0 0.0
        %192 = vmatpush1.msra.mxu0 0.0
        %193 = vmatprep.subr.mxu0 0.0
        %194 = vmatpush1.msra.mxu0 0.0
        %195 = vmatprep.subr.mxu0 0.0
        %196 = vmatpush1.msra.mxu0 0.0
        %197 = vmatprep.subr.mxu0 0.0
        %198 = vmatpush1.msra.mxu0 0.0
        %199 = vmatprep.subr.mxu0 0.0
        %200 = vmatpush1.msra.mxu0 0.0
        %201 = vmatprep.subr.mxu0 0.0
        %202 = vmatpush1.msra.mxu0 0.0
        %203 = vmatprep.subr.mxu0 0.0
        %204 = vmatpush1.msra.mxu0 0.0
        %205 = vmatprep.subr.mxu0 0.0
        %206 = vmatpush1.msra.mxu0 0.0
        %207 = vmatprep.subr.mxu0 0.0
        %208 = vmatpush1.msra.mxu0 0.0
        %209 = vmatprep.subr.mxu0 0.0
        %210 = vmatpush1.msra.mxu0 0.0
        %211 = vmatprep.subr.mxu0 0.0
        %212 = vmatpush1.msra.mxu0 0.0
        %213 = vmatprep.subr.mxu0 0.0
        %214 = vmatpush1.msra.mxu0 0.0
        %215 = vmatprep.subr.mxu0 0.0
        %216 = vmatpush1.msra.mxu0 0.0
        %217 = vmatprep.subr.mxu0 0.0
        %218 = vmatpush1.msra.mxu0 0.0
        %219 = vmatprep.subr.mxu0 0.0
        %220 = vmatpush1.msra.mxu0 0.0
        %221 = vmatprep.subr.mxu0 0.0
        %222 = vmatpush1.msra.mxu0 0.0
        %223 = vmatprep.subr.mxu0 0.0
        %224 = vmatpush1.msra.mxu0 0.0
        %225 = vmatprep.subr.mxu0 0.0
        %226 = vmatpush1.msra.mxu0 0.0
        %227 = vmatprep.subr.mxu0 0.0
        %228 = vmatpush1.msra.mxu0 0.0
        %229 = vmatprep.subr.mxu0 0.0
        %230 = vmatpush1.msra.mxu0 0.0
        %231 = vmatprep.subr.mxu0 0.0
        %232 = vmatpush1.msra.mxu0 0.0
        %233 = vmatprep.subr.mxu0 0.0
        %234 = vmatpush1.msra.mxu0 0.0
        %235 = vmatprep.subr.mxu0 0.0
        %236 = vmatpush1.msra.mxu0 0.0
        %237 = vmatprep.subr.mxu0 0.0
        %238 = vmatpush1.msra.mxu0 0.0
        %239 = vmatprep.subr.mxu0 0.0
        %240 = vmatpush1.msra.mxu0 0.0
        %241 = vmatprep.subr.mxu0 0.0
        %242 = vmatpush1.msra.mxu0 0.0
        %243 = vmatprep.subr.mxu0 0.0
        %244 = vmatpush1.msra.mxu0 0.0
        %245 = vmatprep.subr.mxu0 0.0
        %246 = vmatpush1.msra.mxu0 0.0
        %247 = vmatprep.mubr.f32.mxu0 0.0
        %248 = vmatmul.mubr.f32.gmra.mrb[0].mxu0 %v181
        %v249 = vpop.f32.mrb[0].mxu0
        %v250 = vadd.f32 0.0, %v249
        %v251 = vpop.f32.mrb[0].mxu0
        %v252 = vadd.f32 0.0, %v251
        %253 = vdwg.mxu0
        %254 = vmatprep.subr.mxu0 %v174
        %255 = vmatpush1.msra.mxu0 %v173
        %256 = vmatprep.subr.mxu0 %v178
        %257 = vmatpush1.msra.mxu0 %v177
        %258 = vmatprep.subr.mxu0 0.0
        %259 = vmatpush1.msra.mxu0 0.0
        %260 = vmatprep.subr.mxu0 0.0
        %261 = vmatpush1.msra.mxu0 0.0
        %262 = vmatprep.subr.mxu0 0.0
        %263 = vmatpush1.msra.mxu0 0.0
        %264 = vmatprep.subr.mxu0 0.0
        %265 = vmatpush1.msra.mxu0 0.0
        %266 = vmatprep.subr.mxu0 0.0
        %267 = vmatpush1.msra.mxu0 0.0
        %268 = vmatprep.subr.mxu0 0.0
        %269 = vmatpush1.msra.mxu0 0.0
        %270 = vmatprep.subr.mxu0 0.0
        %271 = vmatpush1.msra.mxu0 0.0
        %272 = vmatprep.subr.mxu0 0.0
        %273 = vmatpush1.msra.mxu0 0.0
        %274 = vmatprep.subr.mxu0 0.0
        %275 = vmatpush1.msra.mxu0 0.0
        %276 = vmatprep.subr.mxu0 0.0
        %277 = vmatpush1.msra.mxu0 0.0
        %278 = vmatprep.subr.mxu0 0.0
        %279 = vmatpush1.msra.mxu0 0.0
        %280 = vmatprep.subr.mxu0 0.0
        %281 = vmatpush1.msra.mxu0 0.0
        %282 = vmatprep.subr.mxu0 0.0
        %283 = vmatpush1.msra.mxu0 0.0
        %284 = vmatprep.subr.mxu0 0.0
        %285 = vmatpush1.msra.mxu0 0.0
        %286 = vmatprep.subr.mxu0 0.0
        %287 = vmatpush1.msra.mxu0 0.0
        %288 = vmatprep.subr.mxu0 0.0
        %289 = vmatpush1.msra.mxu0 0.0
        %290 = vmatprep.subr.mxu0 0.0
        %291 = vmatpush1.msra.mxu0 0.0
        %292 = vmatprep.subr.mxu0 0.0
        %293 = vmatpush1.msra.mxu0 0.0
        %294 = vmatprep.subr.mxu0 0.0
        %295 = vmatpush1.msra.mxu0 0.0
        %296 = vmatprep.subr.mxu0 0.0
        %297 = vmatpush1.msra.mxu0 0.0
        %298 = vmatprep.subr.mxu0 0.0
        %299 = vmatpush1.msra.mxu0 0.0
        %300 = vmatprep.subr.mxu0 0.0
        %301 = vmatpush1.msra.mxu0 0.0
        %302 = vmatprep.subr.mxu0 0.0
        %303 = vmatpush1.msra.mxu0 0.0
        %304 = vmatprep.subr.mxu0 0.0
        %305 = vmatpush1.msra.mxu0 0.0
        %306 = vmatprep.subr.mxu0 0.0
        %307 = vmatpush1.msra.mxu0 0.0
        %308 = vmatprep.subr.mxu0 0.0
        %309 = vmatpush1.msra.mxu0 0.0
        %310 = vmatprep.subr.mxu0 0.0
        %311 = vmatpush1.msra.mxu0 0.0
        %312 = vmatprep.subr.mxu0 0.0
        %313 = vmatpush1.msra.mxu0 0.0
        %314 = vmatprep.subr.mxu0 0.0
        %315 = vmatpush1.msra.mxu0 0.0
        %316 = vmatprep.subr.mxu0 0.0
        %317 = vmatpush1.msra.mxu0 0.0
        %318 = vmatprep.mubr.f32.mxu0 0.0
        %319 = vmatmul.mubr.f32.gmra.mrb[0].mxu0 %v181
        %v320 = vpop.f32.mrb[0].mxu0
        %v321 = vadd.f32 0.0, %v320
        %v322 = vpop.f32.mrb[0].mxu0
        %v323 = vadd.f32 0.0, %v322
        %324 = vdwg.mxu0
        %v325 = vmul.f32 %v250, 0.5
        %v326 = vmul.f32 %v252, 0.5
        %v327 = vmul.f32 %v321, 0.5
        %v328 = vmul.f32 %v323, 0.5
        %v329 = vld [vmem:[#allocation2] sm:$0xff]
        %330 = vmatprep.subr.mxu0 %v326
        %331 = vmatpush1.xpose.msra.mxu0 %v325
        %332 = vmatprep.subr.mxu0 0.0
        %333 = vmatpush1.xpose.msra.mxu0 0.0
        %334 = vmatprep.subr.mxu0 0.0
        %335 = vmatpush1.xpose.msra.mxu0 0.0
        %336 = vmatprep.subr.mxu0 0.0
        %337 = vmatpush1.xpose.msra.mxu0 0.0
        %338 = vmatprep.subr.mxu0 0.0
        %339 = vmatpush1.xpose.msra.mxu0 0.0
        %340 = vmatprep.subr.mxu0 0.0
        %341 = vmatpush1.xpose.msra.mxu0 0.0
        %342 = vmatprep.subr.mxu0 0.0
        %343 = vmatpush1.xpose.msra.mxu0 0.0
        %344 = vmatprep.subr.mxu0 0.0
        %345 = vmatpush1.xpose.msra.mxu0 0.0
        %346 = vmatprep.subr.mxu0 0.0
        %347 = vmatpush1.xpose.msra.mxu0 0.0
        %348 = vmatprep.subr.mxu0 0.0
        %349 = vmatpush1.xpose.msra.mxu0 0.0
        %350 = vmatprep.subr.mxu0 0.0
        %351 = vmatpush1.xpose.msra.mxu0 0.0
        %352 = vmatprep.subr.mxu0 0.0
        %353 = vmatpush1.xpose.msra.mxu0 0.0
        %354 = vmatprep.subr.mxu0 0.0
        %355 = vmatpush1.xpose.msra.mxu0 0.0
        %356 = vmatprep.subr.mxu0 0.0
        %357 = vmatpush1.xpose.msra.mxu0 0.0
        %358 = vmatprep.subr.mxu0 0.0
        %359 = vmatpush1.xpose.msra.mxu0 0.0
        %360 = vmatprep.subr.mxu0 0.0
        %361 = vmatpush1.xpose.msra.mxu0 0.0
        %362 = vmatprep.subr.mxu0 0.0
        %363 = vmatpush1.xpose.msra.mxu0 0.0
        %364 = vmatprep.subr.mxu0 0.0
        %365 = vmatpush1.xpose.msra.mxu0 0.0
        %366 = vmatprep.subr.mxu0 0.0
        %367 = vmatpush1.xpose.msra.mxu0 0.0
        %368 = vmatprep.subr.mxu0 0.0
        %369 = vmatpush1.xpose.msra.mxu0 0.0
        %370 = vmatprep.subr.mxu0 0.0
        %371 = vmatpush1.xpose.msra.mxu0 0.0
        %372 = vmatprep.subr.mxu0 0.0
        %373 = vmatpush1.xpose.msra.mxu0 0.0
        %374 = vmatprep.subr.mxu0 0.0
        %375 = vmatpush1.xpose.msra.mxu0 0.0
        %376 = vmatprep.subr.mxu0 0.0
        %377 = vmatpush1.xpose.msra.mxu0 0.0
        %378 = vmatprep.subr.mxu0 0.0
        %379 = vmatpush1.xpose.msra.mxu0 0.0
        %380 = vmatprep.subr.mxu0 0.0
        %381 = vmatpush1.xpose.msra.mxu0 0.0
        %382 = vmatprep.subr.mxu0 0.0
        %383 = vmatpush1.xpose.msra.mxu0 0.0
        %384 = vmatprep.subr.mxu0 0.0
        %385 = vmatpush1.xpose.msra.mxu0 0.0
        %386 = vmatprep.subr.mxu0 0.0
        %387 = vmatpush1.xpose.msra.mxu0 0.0
        %388 = vmatprep.subr.mxu0 0.0
        %389 = vmatpush1.xpose.msra.mxu0 0.0
        %390 = vmatprep.subr.mxu0 0.0
        %391 = vmatpush1.xpose.msra.mxu0 0.0
        %392 = vmatprep.subr.mxu0 0.0
        %393 = vmatpush1.xpose.msra.mxu0 0.0
        %394 = vmatprep.mubr.f32.mxu0 %v326
        %395 = vmatmul.mubr.f32.gmra.mrb[0].mxu0 %v325
        %v396 = vpop.f32.mrb[0].mxu0
        %v397 = vadd.f32 0.0, %v396
        %v398 = vpop.f32.mrb[0].mxu0
        %399 = vdwg.mxu0
        %400 = vmatprep.subr.mxu0 %v328
        %401 = vmatpush1.xpose.msra.mxu0 %v327
        %402 = vmatprep.subr.mxu0 0.0
        %403 = vmatpush1.xpose.msra.mxu0 0.0
        %404 = vmatprep.subr.mxu0 0.0
        %405 = vmatpush1.xpose.msra.mxu0 0.0
        %406 = vmatprep.subr.mxu0 0.0
        %407 = vmatpush1.xpose.msra.mxu0 0.0
        %408 = vmatprep.subr.mxu0 0.0
        %409 = vmatpush1.xpose.msra.mxu0 0.0
        %410 = vmatprep.subr.mxu0 0.0
        %411 = vmatpush1.xpose.msra.mxu0 0.0
        %412 = vmatprep.subr.mxu0 0.0
        %413 = vmatpush1.xpose.msra.mxu0 0.0
        %414 = vmatprep.subr.mxu0 0.0
        %415 = vmatpush1.xpose.msra.mxu0 0.0
        %416 = vmatprep.subr.mxu0 0.0
        %417 = vmatpush1.xpose.msra.mxu0 0.0
        %418 = vmatprep.subr.mxu0 0.0
        %419 = vmatpush1.xpose.msra.mxu0 0.0
        %420 = vmatprep.subr.mxu0 0.0
        %421 = vmatpush1.xpose.msra.mxu0 0.0
        %422 = vmatprep.subr.mxu0 0.0
        %423 = vmatpush1.xpose.msra.mxu0 0.0
        %424 = vmatprep.subr.mxu0 0.0
        %425 = vmatpush1.xpose.msra.mxu0 0.0
        %426 = vmatprep.subr.mxu0 0.0
        %427 = vmatpush1.xpose.msra.mxu0 0.0
        %428 = vmatprep.subr.mxu0 0.0
        %429 = vmatpush1.xpose.msra.mxu0 0.0
        %430 = vmatprep.subr.mxu0 0.0
        %431 = vmatpush1.xpose.msra.mxu0 0.0
        %432 = vmatprep.subr.mxu0 0.0
        %433 = vmatpush1.xpose.msra.mxu0 0.0
        %434 = vmatprep.subr.mxu0 0.0
        %435 = vmatpush1.xpose.msra.mxu0 0.0
        %436 = vmatprep.subr.mxu0 0.0
        %437 = vmatpush1.xpose.msra.mxu0 0.0
        %438 = vmatprep.subr.mxu0 0.0
        %439 = vmatpush1.xpose.msra.mxu0 0.0
        %440 = vmatprep.subr.mxu0 0.0
        %441 = vmatpush1.xpose.msra.mxu0 0.0
        %442 = vmatprep.subr.mxu0 0.0
        %443 = vmatpush1.xpose.msra.mxu0 0.0
        %444 = vmatprep.subr.mxu0 0.0
        %445 = vmatpush1.xpose.msra.mxu0 0.0
        %446 = vmatprep.subr.mxu0 0.0
        %447 = vmatpush1.xpose.msra.mxu0 0.0
        %448 = vmatprep.subr.mxu0 0.0
        %449 = vmatpush1.xpose.msra.mxu0 0.0
        %450 = vmatprep.subr.mxu0 0.0
        %451 = vmatpush1.xpose.msra.mxu0 0.0
        %452 = vmatprep.subr.mxu0 0.0
        %453 = vmatpush1.xpose.msra.mxu0 0.0
        %454 = vmatprep.subr.mxu0 0.0
        %455 = vmatpush1.xpose.msra.mxu0 0.0
        %456 = vmatprep.subr.mxu0 0.0
        %457 = vmatpush1.xpose.msra.mxu0 0.0
        %458 = vmatprep.subr.mxu0 0.0
        %459 = vmatpush1.xpose.msra.mxu0 0.0
        %460 = vmatprep.subr.mxu0 0.0
        %461 = vmatpush1.xpose.msra.mxu0 0.0
        %462 = vmatprep.subr.mxu0 0.0
        %463 = vmatpush1.xpose.msra.mxu0 0.0
        %464 = vmatprep.mubr.f32.mxu0 %v328
        %465 = vmatmul.mubr.f32.gmra.mrb[0].mxu0 %v327
        %v466 = vpop.f32.mrb[0].mxu0
        %v467 = vadd.f32 %v397, %v466
        %v468 = vpop.f32.mrb[0].mxu0
        %469 = vdwg.mxu0
        %v470 = vadd.f32 %v329, %v467
        %vm471 = vcmask 64512
        %472 = vst.msk [vmem:[#allocation2] sm:$0xff] %vm471, %v470
        %p473 = scmp.eq.s32.totalorder %s18, 1
        // Predicated region
        $region41: #{tpu_custom_call.1} parent=27 // pred_check
          %p474 = pneg %p473
        $region42: #{tpu_custom_call.1} parent=27 // pred_check_branch
          %476 = sbr.rel (%p474) target = $region44
        $region43: #{tpu_custom_call.1} parent=27 // pred_region
          %v477 = vld [vmem:[#allocation2] sm:$0xff]
          %v478 = vlaneseq
          %v479 = vshrl.u32 %v478, 7
          %v480 = vlaneseq
          %v481 = vand.u32 %v480, 127
          %vm482 = vcmp.eq.s32.totalorder %v479, %v481
          %v483 = vsel %vm482, %v477, 0.0
          %v484 = vsel %vm471, %v483, 0.0
          %485 = vadd.xlane.f32.xlu0 %v484
          %v486 = vpop.xlane.xlu0 %485
          %v487 = vrot.slane %v484, 4
          %v488 = vadd.f32 %v484, %v487
          %v489 = vrot.slane %v488, 2
          %v490 = vadd.f32 %v488, %v489
          %v491 = vrot.slane %v490, 1
          %v492 = vadd.f32 %v490, %v491
          %v493 = vadd.f32 %v486, %v492
          %v494 = vmul.f32 %v477, 2.0
          %v495 = vsub.f32 %v493, %v494
          %v496 = vmax.f32 %v495, 1e-12
          %vm497 = vcmp.lt.s32.totalorder %v479, 0
          %v498 = vsub.s32 0, %v479
          %v499 = vsel %vm497, %v498, %v479
          %v500 = vshrl.u32 %v499, 2
          %v501 = vand.u32 %v499, 3
          %v502 = vsub.s32 0, %v501
          %v503 = vsel %vm497, %v502, %v501
          %vm504 = vcmp.ne.s32.totalorder %v503, 0
          %vm505 = vcmp.lt.s32.totalorder %v503, 0
          %vm506 = vmand %vm505, %vm504
          %v507 = vadd.s32 %v503, 4
          %v508 = vsel %vm506, %v507, %v503
          %vm509 = vcmp.lt.s32.totalorder %v481, 0
          %v510 = vsub.s32 0, %v481
          %v511 = vsel %vm509, %v510, %v481
          %v512 = vshrl.u32 %v511, 2
          %v513 = vand.u32 %v511, 3
          %v514 = vsub.s32 0, %v513
          %v515 = vsel %vm509, %v514, %v513
          %vm516 = vcmp.ne.s32.totalorder %v515, 0
          %vm517 = vcmp.lt.s32.totalorder %v515, 0
          %vm518 = vmand %vm517, %vm516
          %v519 = vadd.s32 %v515, 4
          %v520 = vsel %vm518, %v519, %v515
          %vm521 = vcmp.eq.s32.totalorder %v508, %v520
          %v522 = vsel %vm521, %v496, -inf
          %v523 = vsel %vm471, %v522, -inf
          %524 = vmax.xlane.f32.xlu0 %v523
          %v525 = vpop.xlane.xlu0 %524
          %v526 = vsel %vm521, inf, %v496
          %v527 = vsel %vm471, %v526, inf
          %528 = vmin.xlane.f32.xlu0 %v527
          %v529 = vpop.xlane.xlu0 %528
          %v530 = vrsqrt.pop %v525
          %v531 = vmul.f32 %v525, %v530
          %vm532 = vcmp.eq.f32.partialorder %v525, inf
          %v533 = vsel %vm532, %v525, %v531
          %vm534 = vcmp.eq.f32.partialorder %v525, 0.0
          %v535 = vand.u32 %v525, 2147483648
          %v536 = vsel %vm534, %v535, %v533
          %v537 = vrsqrt.pop %v529
          %v538 = vmul.f32 %v529, %v537
          %vm539 = vcmp.eq.f32.partialorder %v529, inf
          %v540 = vsel %vm539, %v529, %v538
          %vm541 = vcmp.eq.f32.partialorder %v529, 0.0
          %v542 = vand.u32 %v529, 2147483648
          %v543 = vsel %vm541, %v542, %v540
          %v544 = vsub.f32 %v536, %v543
          %v545 = vadd.f32 %v544, 0.3
          %v546 = vmax.f32 %v545, 0.0
          %vm547 = vcmask 7168
          %v548 = vsel %vm547, %v546, 0.0
          %549 = vadd.xlane.f32.xlu0 %v548
          %v550 = vpop.xlane.xlu0 %549
          %v551 = vrot.slane %v550, 4
          %v552 = vadd.f32 %v550, %v551
          %v553 = vrot.slane %v552, 2
          %v554 = vadd.f32 %v552, %v553
          %v555 = vrot.slane %v554, 1
          %v556 = vadd.f32 %v554, %v555
          %s557 = vtos %v556
          %v558 = vrcp.pop 8.0
          %s559 = vtos %v558
          %s560 = smul.f32 %s557, %s559
          %s561 = scalar_lea.smem [#allocation8], 0
          %562 = sst [smem:[%s561]] %s560
        $region44: #{tpu_custom_call.1} parent=27 // pred_fallthru
          _
        // Predicated region
        $region45: #{tpu_custom_call.1} parent=27 // pred_check
          %p563 = pneg %p78
        $region46: #{tpu_custom_call.1} parent=27 // pred_check_branch
          %565 = sbr.rel (%p563) target = $region48
        $region47: #{tpu_custom_call.1} parent=27 // pred_region
          %s567 = ssub.s32 16, 16
          %568 = vsyncadd [#allocation5], %s567
          %571 = dma.smem_to_hbm [#allocation8], 16, %s2, [#allocation5]
        $region48: #{tpu_custom_call.1} parent=27 // pred_fallthru
          _
        // Predicated region
        $region49: #{tpu_custom_call.1} parent=27 // pred_check
          %p572 = pneg %p78
        $region50: #{tpu_custom_call.1} parent=27 // pred_check_branch
          %574 = sbr.rel (%p572) target = $region52
        $region51: #{tpu_custom_call.1} parent=27 // pred_region
          %575 = dma.done [#allocation5], 16
        $region52: #{tpu_custom_call.1} parent=27 // pred_fallthru
          _
        %576 = sfence
      $region28: #{tpu_custom_call.1} parent=5 // pred_fallthru
        _
      %p577 = scmp.le.s32.totalorder 2, %s13
      // Predicated region
      $region53: #{tpu_custom_call.1} parent=5 // pred_check
        %p578 = pneg %p577
      $region54: #{tpu_custom_call.1} parent=5 // pred_check_branch
        %580 = sbr.rel (%p578) target = $region56
      $region55: #{tpu_custom_call.1} parent=5 // pred_region
        %s581 = ssub.s32 %s13, 2
      $region56: #{tpu_custom_call.1} parent=5 // pred_fallthru
        _
    $region6: #{tpu_custom_call.1} parent=1 // loop_footer
      %s17 = sadd.s32 1, %s13
    $region7: #{tpu_custom_call.1} parent=1 // loop_footer_branch
      %12 = sbr.rel target = $region3
    $region8: #{tpu_custom_call.1} parent=1 // loop_exit
      _
    %582 = vsyncpa [#allocation4], 1
    %s583 = scalar_lea.sflag [#allocation4], 1
    %584 = vsyncpa %s583, 1
    %585 = vsyncpa [#allocation7], 1
    %s586 = scalar_lea.sflag [#allocation7], 1
    %587 = vsyncpa %s586, 1
    %588 = vsyncpa [#allocation5], 1
    %s589 = scalar_lea.sflag [#allocation5], 1
    %590 = vsyncpa %s589, 1

</llo_original>
